<compile_context>
chip_gen: v5e
topology: v5e:2x2
jax: 0.10.0
libtpu: 0.0.40
codegen_flags: <defaults>
</compile_context>

<pallas_src>
import functools

import jax
import jax.numpy as jnp
from jax.experimental import pallas as pl
from jax.experimental.pallas import tpu as pltpu


def _round_up(x, m):
    return (x + m - 1) // m * m


def _pick_tile_n(n_rows, n_cols, itemsize, tile_n=None):
    if tile_n is None:
        # ~1 MiB pred block: large enough to reach ~85% of HBM roofline, small
        # enough that double-buffered pred + loss + labels blocks stay well
        # under the 16 MiB default scoped VMEM on v5e (and 64 MiB phys on v7x).
        tile_n = (1 << 20) // max(n_cols * itemsize, 1)
        tile_n = max(64, min(tile_n, 2048))
    if tile_n >= n_rows:
        return n_rows                      # single tile; full-extent row dim is legal
    return max(8, (min(tile_n, n_rows) // 8) * 8)


def _scalar_block(val):
    """(8, 128) lane-dense block holding `val` at [0, 0] and zeros elsewhere."""
    r = jax.lax.broadcasted_iota(jnp.int32, (8, 128), 0)
    c = jax.lax.broadcasted_iota(jnp.int32, (8, 128), 1)
    return jnp.where((r == 0) & (c == 0), val, jnp.zeros((8, 128), val.dtype))


def _focal_loss_math(x, labels, gamma, alpha):
    """Elementwise sigmoid focal loss for a (rows, C) tile of f32 logits."""
    cls_ids = jax.lax.broadcasted_iota(jnp.int32, x.shape, 1)
    pos = cls_ids == labels                     # label == C (background) -> all False
    # One shared exp(-|x|) feeds both sigmoid and the BCE log term: 3 EUP ops/elem.
    s = jnp.exp(-jnp.abs(x))
    inv = pl.reciprocal(1.0 + s)                # exact (keeps parity with reference)
    p = jnp.where(x >= 0.0, inv, s * inv)       # == sigmoid(x), numerically stable
    # t in {0,1}: use selects instead of lerps (fewer VALU ops, same values).
    pt = jnp.where(pos, 1.0 - p, p)
    alpha_w = jnp.where(pos, alpha, 1.0 - alpha)
    pt_pow = pt * pt if gamma == 2.0 else pt ** gamma
    # numerically-stable binary_cross_entropy_with_logits (reduction='none')
    bce = jnp.maximum(x, 0.0) - jnp.where(pos, x, 0.0) + jnp.log1p(s)
    return bce * (alpha_w * pt_pow)


# ----------------------------------------------------------------------------
# Kernel 1a: elementwise sigmoid focal loss (row-tiled, unpadded (N, C) output)
# ----------------------------------------------------------------------------
def _focal_elem_kernel(pred_ref, tgt_ref, loss_ref, *, gamma, alpha):
    x = pred_ref[...].astype(jnp.float32)
    loss_ref[...] = _focal_loss_math(x, tgt_ref[...], gamma, alpha)


# ----------------------------------------------------------------------------
# Kernel 1b: fused elementwise loss + per-tile partial sum (drop=False path).
# No (N, C) loss buffer is ever written.
# ----------------------------------------------------------------------------
def _focal_sum_kernel(pred_ref, tgt_ref, psum_ref, *, gamma, alpha, n_rows, tile_n):
    x = pred_ref[...].astype(jnp.float32)
    loss = _focal_loss_math(x, tgt_ref[...], gamma, alpha)
    rows = jax.lax.broadcasted_iota(jnp.int32, x.shape, 0) + pl.program_id(0) * tile_n
    loss = jnp.where(rows < n_rows, loss, 0.0)
    psum_ref[...] = _scalar_block(jnp.sum(loss))[None]


# ----------------------------------------------------------------------------
# Kernel 2: streaming "count(loss >= thr)" -> per-tile partial counts.
# Drives the exact bit-level binary search for the drop threshold.
# ----------------------------------------------------------------------------
def _count_ge_kernel(thr_ref, loss_ref, cnt_ref, *, n_rows, tile_n):
    loss = loss_ref[...]
    rows = jax.lax.broadcasted_iota(jnp.int32, loss.shape, 0) + pl.program_id(0) * tile_n
    sel = (loss >= thr_ref[0, 0]) & (rows < n_rows)
    # per-tile count <= tile elements (< 2^24), so an f32 sum is exact
    cnt = jnp.sum(jnp.where(sel, 1.0, 0.0)).astype(jnp.int32)
    cnt_ref[...] = _scalar_block(cnt)[None]


# ----------------------------------------------------------------------------
# Kernel 3a: drop (keep loss <= std) + per-tile partial sums ('mean'/'sum')
# ----------------------------------------------------------------------------
def _drop_sum_kernel(std_ref, loss_ref, psum_ref, *, n_rows, tile_n):
    loss = loss_ref[...]
    rows = jax.lax.broadcasted_iota(jnp.int32, loss.shape, 0) + pl.program_id(0) * tile_n
    keep = (loss <= std_ref[0, 0]) & (rows < n_rows)
    psum_ref[...] = _scalar_block(jnp.sum(jnp.where(keep, loss, 0.0)))[None]


# ----------------------------------------------------------------------------
# Kernel 3b: drop only (reduction='none' needs the full dropped array)
# ----------------------------------------------------------------------------
def _drop_none_kernel(std_ref, loss_ref, out_ref):
    loss = loss_ref[...]
    out_ref[...] = jnp.where(loss > std_ref[0, 0], 0.0, loss)


# ----------------------------------------------------------------------------
# Wrapper mirroring FocalLoss.forward (sigmoid path, target as class ids)
# ----------------------------------------------------------------------------
def focal_loss_forward(pred, target, *, gamma=2.0, alpha=0.25,
                       reduction='mean', loss_weight=1.0, drop=True,
                       avg_factor=None, tile_n=None):
    # TODO(synk): per-sample `weight` and (N, C) one-hot targets are not
    # supported by this kernel; only the class-id target path is implemented.
    if reduction not in ('none', 'mean', 'sum'):
        raise ValueError(f"unsupported reduction: {reduction}")

    N, C = pred.shape
    numel = N * C
    tile_n = _pick_tile_n(N, C, pred.dtype.itemsize, tile_n)
    grid_n = pl.cdiv(N, tile_n)
    labels = target.reshape(N, 1).astype(jnp.int32)

    pred_spec = pl.BlockSpec((tile_n, C), lambda i: (i, 0))
    tgt_spec = pl.BlockSpec((tile_n, 1), lambda i: (i, 0))
    loss_spec = pl.BlockSpec((tile_n, C), lambda i: (i, 0))
    smem_spec = pl.BlockSpec(memory_space=pltpu.MemorySpace.SMEM)
    psum_spec = pl.BlockSpec((1, 8, 128), lambda i: (i, 0, 0))
    parallel = pltpu.CompilerParams(dimension_semantics=("parallel",))

    pred_bytes = numel * pred.dtype.itemsize
    cost_elem = pl.CostEstimate(flops=22 * numel, transcendentals=3 * numel,
                                bytes_accessed=pred_bytes + N * 4 + numel * 4)

    # ---- drop=False with 'mean'/'sum': fully fused, no loss materialization
    if not drop and reduction in ('mean', 'sum'):
        psums = pl.pallas_call(
            functools.partial(_focal_sum_kernel, gamma=gamma, alpha=alpha,
                              n_rows=N, tile_n=tile_n),
            out_shape=jax.ShapeDtypeStruct((grid_n, 8, 128), jnp.float32),
            grid_spec=pltpu.PrefetchScalarGridSpec(
                num_scalar_prefetch=0, grid=(grid_n,),
                in_specs=[pred_spec, tgt_spec], out_specs=psum_spec),
            compiler_params=parallel,
            cost_estimate=pl.CostEstimate(
                flops=24 * numel, transcendentals=3 * numel,
                bytes_accessed=pred_bytes + N * 4 + grid_n * 4096),
        )(pred, labels)
        total = jnp.sum(psums)
        if reduction == 'mean':
            # NOTE: recent mmdet divides by (avg_factor + eps); exact division kept.
            denom = float(numel) if avg_factor is None else avg_factor
            total = total / denom
        return total * loss_weight, -1

    # ---- Pass 1: elementwise loss, written unpadded (N, C)
    loss = pl.pallas_call(
        functools.partial(_focal_elem_kernel, gamma=gamma, alpha=alpha),
        out_shape=jax.ShapeDtypeStruct((N, C), jnp.float32),
        grid_spec=pltpu.PrefetchScalarGridSpec(
            num_scalar_prefetch=0, grid=(grid_n,),
            in_specs=[pred_spec, tgt_spec], out_specs=loss_spec),
        compiler_params=parallel,
        cost_estimate=cost_elem,
    )(pred, labels)

    if reduction == 'none' and not drop:
        return loss * loss_weight, -1

    # ---- drop threshold: exact (length+1)-th largest loss value.
    # Bit-level binary search (31 fixed iterations) using a streaming count
    # kernel; replaces the previous XLA top_k (near-full sort for k ~ 10%·n).
    # Invariant relies on focal losses being finite and >= 0, so the f32 value
    # ordering equals the ordering of their non-negative int32 bit patterns.
    flen = numel * 0.1
    length = 0 if flen <= 1 else int(flen)
    k = jnp.int32(length + 1)

    def _count_ge(thr_2d):
        cnts = pl.pallas_call(
            functools.partial(_count_ge_kernel, n_rows=N, tile_n=tile_n),
            out_shape=jax.ShapeDtypeStruct((grid_n, 8, 128), jnp.int32),
            grid_spec=pltpu.PrefetchScalarGridSpec(
                num_scalar_prefetch=0, grid=(grid_n,),
                in_specs=[smem_spec, loss_spec], out_specs=psum_spec),
            compiler_params=parallel,
            cost_estimate=pl.CostEstimate(
                flops=4 * numel, transcendentals=0,
                bytes_accessed=numel * 4 + grid_n * 4096 + 4),
        )(thr_2d, loss)
        return jnp.sum(cnts)

    def _search_body(_, carry):
        lo, hi = carry
        mid = lo + (hi - lo + 1) // 2
        thr = jax.lax.bitcast_convert_type(mid, jnp.float32).reshape(1, 1)
        ge = _count_ge(thr) >= k
        return jnp.where(ge, mid, lo), jnp.where(ge, hi, mid - 1)

    lo, _ = jax.lax.fori_loop(0, 31, _search_body,
                              (jnp.int32(0), jnp.int32(0x7F7FFFFF)))
    std = jax.lax.bitcast_convert_type(lo, jnp.float32).reshape(1, 1)

    if reduction == 'none':
        dropped = pl.pallas_call(
            _drop_none_kernel,
            out_shape=jax.ShapeDtypeStruct((N, C), jnp.float32),
            grid_spec=pltpu.PrefetchScalarGridSpec(
                num_scalar_prefetch=0, grid=(grid_n,),
                in_specs=[smem_spec, loss_spec], out_specs=loss_spec),
            compiler_params=parallel,
            cost_estimate=pl.CostEstimate(flops=numel, transcendentals=0,
                                          bytes_accessed=2 * numel * 4 + 4),
        )(std, loss)
        return dropped * loss_weight, -1

    # ---- 'mean' / 'sum' with drop: single drop+sum pass, per-tile partials
    psums = pl.pallas_call(
        functools.partial(_drop_sum_kernel, n_rows=N, tile_n=tile_n),
        out_shape=jax.ShapeDtypeStruct((grid_n, 8, 128), jnp.float32),
        grid_spec=pltpu.PrefetchScalarGridSpec(
            num_scalar_prefetch=0, grid=(grid_n,),
            in_specs=[smem_spec, loss_spec], out_specs=psum_spec),
        compiler_params=parallel,
        cost_estimate=pl.CostEstimate(flops=4 * numel, transcendentals=0,
                                      bytes_accessed=numel * 4 + grid_n * 4096 + 4),
    )(std, loss)
    total = jnp.sum(psums)
    if reduction == 'mean':
        # NOTE: recent mmdet divides by (avg_factor + eps); exact division kept.
        denom = float(numel) if avg_factor is None else avg_factor
        total = total / denom
    return total * loss_weight, -1


# ----------------------------------------------------------------------------
# Pure-JAX reference (mirrors py_sigmoid_focal_loss + weight_reduce_loss)
# ----------------------------------------------------------------------------
def _reference(pred, target, gamma=2.0, alpha=0.25, drop=True):
    N, C = pred.shape
    t = jax.nn.one_hot(target, C + 1, dtype=jnp.float32)[:, :C]
    x = pred.astype(jnp.float32)
    p = jax.nn.sigmoid(x)
    pt = (1 - p) * t + p * (1 - t)
    fw = (alpha * t + (1 - alpha) * (1 - t)) * pt ** gamma
    bce = jnp.maximum(x, 0.0) - x * t + jnp.log1p(jnp.exp(-jnp.abs(x)))
    loss = bce * fw
    if drop:
        flat = jnp.sort(loss.reshape(-1))[::-1]
        flen = N * C * 0.1
        length = 0 if flen <= 1 else int(flen)
        std = flat[length]
        loss = jnp.where(loss > std, 0.0, loss)
    return loss.mean()


if __name__ == "__main__":
    key = jax.random.PRNGKey(0)
    k_pred, k_tgt = jax.random.split(key)

    # Small shapes; tile_n=32 gives a 4-step row grid with a partial last tile,
    # exercising the row masks, the binary-search threshold, and all branches.
    N, C = 100, 16
    pred = jax.random.normal(k_pred, (N, C), dtype=jnp.float32) * 2.0
    # labels in [0, C]; label == C means background (all-zero one-hot row)
    target = jax.random.randint(k_tgt, (N,), 0, C + 1, dtype=jnp.int32)

    # FocalLoss(use_sigmoid=True, gamma=2.0, alpha=0.25, reduction='mean',
    #           loss_weight=1.0, activated=False) — no learnable parameters.
    loss_cls, indi = focal_loss_forward(pred, target, gamma=2.0, alpha=0.25,
                                        reduction='mean', loss_weight=1.0,
                                        drop=True, tile_n=32)
    loss_cls = jax.block_until_ready(loss_cls)
    ref = jax.block_until_ready(_reference(pred, target, drop=True))
    assert jnp.allclose(loss_cls, ref, rtol=1e-4, atol=1e-6), (loss_cls, ref)
    assert indi == -1

    # drop=False path: fully fused elementwise + per-tile sums (no loss buffer).
    loss_nd, _ = focal_loss_forward(pred, target, reduction='mean',
                                    drop=False, tile_n=32)
    loss_nd = jax.block_until_ready(loss_nd)
    ref_nd = jax.block_until_ready(_reference(pred, target, drop=False))
    assert jnp.allclose(loss_nd, ref_nd, rtol=1e-4, atol=1e-6), (loss_nd, ref_nd)

    # reduction='none' path: elementwise dropped loss; its mean must agree.
    none_out, _ = focal_loss_forward(pred, target, reduction='none',
                                     drop=True, tile_n=32)
    none_out = jax.block_until_ready(none_out)
    assert none_out.shape == (N, C)
    assert jnp.allclose(none_out.mean(), loss_cls, rtol=1e-5, atol=1e-6)

    print("KERNEL_OK")
</pallas_src>

<mosaic_0001>
module attributes {stable_mosaic.version = 11 : i64} {
  func.func @_focal_elem_kernel(%arg0: i32, %arg1: memref<32x16xf32, #tpu.memory_space<vmem>>, %arg2: memref<32x1xi32, #tpu.memory_space<vmem>>, %arg3: memref<32x16xf32, #tpu.memory_space<vmem>>) attributes {dimension_semantics = [#tpu.dimension_semantics<parallel>], iteration_bounds = array<i64: 4>, scalar_prefetch = 0 : i64, scratch_operands = 0 : i64, tpu.core_type = #tpu.core_type<tc>, window_params = [{transform_indices = @transform_0, window_bounds = array<i64: 32, 16>}, {transform_indices = @transform_1, window_bounds = array<i64: 32, 1>}, {transform_indices = @transform_2, window_bounds = array<i64: 32, 16>}]} {
    %c0 = arith.constant 0 : index
    %c0_0 = arith.constant 0 : index
    %0 = vector.load %arg1[%c0, %c0_0] : memref<32x16xf32, #tpu.memory_space<vmem>>, vector<32x16xf32>
    %c0_1 = arith.constant 0 : index
    %c0_2 = arith.constant 0 : index
    %1 = vector.load %arg2[%c0_1, %c0_2] : memref<32x1xi32, #tpu.memory_space<vmem>>, vector<32x1xi32>
    %2 = tpu.iota {dimensions = array<i32: 1>} : vector<32x16xi32>
    %3 = vector.broadcast %1 : vector<32x1xi32> to vector<32x16xi32>
    %4 = arith.cmpi eq, %2, %3 : vector<32x16xi32>
    %5 = math.absf %0 : vector<32x16xf32>
    %cst = arith.constant 0.000000e+00 : f32
    %6 = vector.broadcast %cst : f32 to vector<32x16xf32>
    %7 = arith.subf %6, %5 : vector<32x16xf32>
    %8 = math.exp %7 : vector<32x16xf32>
    %cst_3 = arith.constant 1.000000e+00 : f32
    %9 = vector.broadcast %cst_3 : f32 to vector<32x16xf32>
    %10 = arith.addf %9, %8 : vector<32x16xf32>
    %11 = tpu.reciprocal %10 : vector<32x16xf32> -> vector<32x16xf32>
    %cst_4 = arith.constant 0.000000e+00 : f32
    %12 = vector.broadcast %cst_4 : f32 to vector<32x16xf32>
    %13 = arith.cmpf oge, %0, %12 : vector<32x16xf32>
    %14 = arith.mulf %8, %11 : vector<32x16xf32>
    %15 = arith.select %13, %11, %14 : vector<32x16xi1>, vector<32x16xf32>
    %cst_5 = arith.constant 1.000000e+00 : f32
    %16 = vector.broadcast %cst_5 : f32 to vector<32x16xf32>
    %17 = arith.subf %16, %15 : vector<32x16xf32>
    %18 = arith.select %4, %17, %15 : vector<32x16xi1>, vector<32x16xf32>
    %cst_6 = arith.constant 2.500000e-01 : f32
    %cst_7 = arith.constant 7.500000e-01 : f32
    %19 = vector.broadcast %cst_6 : f32 to vector<32x16xf32>
    %20 = vector.broadcast %cst_7 : f32 to vector<32x16xf32>
    %21 = arith.select %4, %19, %20 : vector<32x16xi1>, vector<32x16xf32>
    %22 = arith.mulf %18, %18 : vector<32x16xf32>
    %cst_8 = arith.constant 0.000000e+00 : f32
    %23 = vector.broadcast %cst_8 : f32 to vector<32x16xf32>
    %24 = arith.maximumf %0, %23 : vector<32x16xf32>
    %cst_9 = arith.constant 0.000000e+00 : f32
    %25 = vector.broadcast %cst_9 : f32 to vector<32x16xf32>
    %26 = arith.select %4, %0, %25 : vector<32x16xi1>, vector<32x16xf32>
    %27 = arith.subf %24, %26 : vector<32x16xf32>
    %28 = math.log1p %8 : vector<32x16xf32>
    %29 = arith.addf %27, %28 : vector<32x16xf32>
    %30 = arith.mulf %21, %22 : vector<32x16xf32>
    %31 = arith.mulf %29, %30 : vector<32x16xf32>
    %c0_10 = arith.constant 0 : index
    %c0_11 = arith.constant 0 : index
    %32 = vector.load %arg3[%c0_10, %c0_11] : memref<32x16xf32, #tpu.memory_space<vmem>>, vector<32x16xf32>
    tpu.vector_store %arg3[%c0_10, %c0_11], %31 {strides = array<i32>} : memref<32x16xf32, #tpu.memory_space<vmem>>, vector<32x16xf32>,
    return
  }
  func.func @transform_0(%arg0: i32) -> (i32, i32) {
    %c0_i32 = arith.constant 0 : i32
    %c0_i32_0 = arith.constant 0 : i32
    return %arg0, %c0_i32 : i32, i32
  }
  func.func @transform_1(%arg0: i32) -> (i32, i32) {
    %c0_i32 = arith.constant 0 : i32
    %c0_i32_0 = arith.constant 0 : i32
    return %arg0, %c0_i32 : i32, i32
  }
  func.func @transform_2(%arg0: i32) -> (i32, i32) {
    %c0_i32 = arith.constant 0 : i32
    %c0_i32_0 = arith.constant 0 : i32
    return %arg0, %c0_i32 : i32, i32
  }
}

</mosaic_0001>

<llo_original>
// kernel: tpu_custom_call.1
$region0: #{tpu_custom_call.1}
  #allocation0 [shape = 'u32[]', space=smem, size = 0x4, offset = 0x4, fixed_abs, tag = 'smem constant byte address 0x4 - core index']
  #allocation1 [shape = 'u32[72,128]{1,0:T(1,128)}', space=vmem, size = 0x9000, scoped, tag = 'internal scratch']
  %s0 = inlined_call_operand.vmem [shape: f32[100,16], index: 0, kind: input, shape index: {}]
  %s1 = inlined_call_operand.vmem [shape: s32[100,1], index: 1, kind: input, shape index: {}]
  %s2 = inlined_call_operand.vmem [shape: f32[100,16], index: 2, kind: output, shape index: {}]
  %s3 = sld [smem:[#allocation0]]
  $region89: #{tpu_custom_call.1} parent=0
    _
  %s5 = ssub.s32 1, %s3
  %s6 = scalar_select 0, %s5, %s3
  $region1: #{tpu_custom_call.1} parent=0
    #allocation2 [shape = 'u8[32768]{0}', space=vmem, size = 0x8000, scoped, tag = 'output window, operand 0']
    loop: start=0, step=1, limit=6
    $region2: #{tpu_custom_call.1} parent=1 // loop_pre_header
      _
    $region3: #{tpu_custom_call.1} parent=1 // loop_header
      %s8 = sphi 0, %s12
      %p9 = scmp.ge.s32.totalorder %s8, 6
      %s18 = sphi 0, %s20
      %s21 = sphi 0, %s18
      %s22 = sphi 0, %s21
      %s38 = sphi 0, %s22
      %s44 = sphi 0, %s46
      %s47 = sphi 0, %s44
      %s48 = sphi 0, %s47
      %s64 = sphi 0, %s48
      %s70 = sphi 0, %s72
      %s73 = sphi 0, %s70
      %s74 = sphi 0, %s73
      %s90 = sphi 0, %s74
    $region4: #{tpu_custom_call.1} parent=1 // loop_header_branch
      %11 = sbr.rel (%p9) target = $region8
    $region5: #{tpu_custom_call.1} parent=1 // loop_body
      %s13 = ssub.s32 %s8, 1
      %s14 = ssub.s32 %s8, 2
      %s15 = sadd.s32 %s8, 1
      %s16 = ssub.s32 %s8, %s15
      %p17 = scmp.eq.s32.totalorder %s16, 0
      %s19 = sadd.s32 %s18, 1
      %s20 = scalar_select %p17, %s18, %s19
      %p23 = pneg %p17
      %p24 = scmp.eq.s32.totalorder %s8, 3
      %p25 = por %p23, %p24
      %p26 = scmp.ne.s32.totalorder %s18, %s21
      %p27 = scmp.eq.s32.totalorder %s8, 0
      %p28 = por %p26, %p27
      %p29 = scmp.ne.s32.totalorder %s18, %s21
      %p30 = scmp.eq.s32.totalorder %s13, 3
      %p31 = por %p29, %p30
      %p32 = scmp.ne.s32.totalorder %s21, %s22
      %p33 = scmp.eq.s32.totalorder %s13, 0
      %p34 = por %p32, %p33
      %p35 = scmp.ne.s32.totalorder %s21, %s22
      %p36 = scmp.eq.s32.totalorder %s14, 3
      %p37 = por %p35, %p36
      %p39 = scmp.ne.s32.totalorder %s22, %s38
      %p40 = scmp.eq.s32.totalorder %s14, 0
      %p41 = por %p39, %p40
      %s42 = ssub.s32 %s8, %s15
      %p43 = scmp.eq.s32.totalorder %s42, 0
      %s45 = sadd.s32 %s44, 1
      %s46 = scalar_select %p43, %s44, %s45
      %p49 = pneg %p43
      %p50 = scmp.eq.s32.totalorder %s8, 3
      %p51 = por %p49, %p50
      %p52 = scmp.ne.s32.totalorder %s44, %s47
      %p53 = scmp.eq.s32.totalorder %s8, 0
      %p54 = por %p52, %p53
      %p55 = scmp.ne.s32.totalorder %s44, %s47
      %p56 = scmp.eq.s32.totalorder %s13, 3
      %p57 = por %p55, %p56
      %p58 = scmp.ne.s32.totalorder %s47, %s48
      %p59 = scmp.eq.s32.totalorder %s13, 0
      %p60 = por %p58, %p59
      %p61 = scmp.ne.s32.totalorder %s47, %s48
      %p62 = scmp.eq.s32.totalorder %s14, 3
      %p63 = por %p61, %p62
      %p65 = scmp.ne.s32.totalorder %s48, %s64
      %p66 = scmp.eq.s32.totalorder %s14, 0
      %p67 = por %p65, %p66
      %s68 = ssub.s32 %s8, %s15
      %p69 = scmp.eq.s32.totalorder %s68, 0
      %s71 = sadd.s32 %s70, 1
      %s72 = scalar_select %p69, %s70, %s71
      %p75 = pneg %p69
      %p76 = scmp.eq.s32.totalorder %s8, 3
      %p77 = por %p75, %p76
      %p78 = scmp.ne.s32.totalorder %s70, %s73
      %p79 = scmp.eq.s32.totalorder %s8, 0
      %p80 = por %p78, %p79
      %p81 = scmp.ne.s32.totalorder %s70, %s73
      %p82 = scmp.eq.s32.totalorder %s13, 3
      %p83 = por %p81, %p82
      %p84 = scmp.ne.s32.totalorder %s73, %s74
      %p85 = scmp.eq.s32.totalorder %s13, 0
      %p86 = por %p84, %p85
      %p87 = scmp.ne.s32.totalorder %s73, %s74
      %p88 = scmp.eq.s32.totalorder %s14, 3
      %p89 = por %p87, %p88
      %p91 = scmp.ne.s32.totalorder %s74, %s90
      %p92 = scmp.eq.s32.totalorder %s14, 0
      %p93 = por %p91, %p92
      %p94 = scmp.le.s32.totalorder 1, %s8
      %p95 = scmp.lt.s32.totalorder %s8, 5
      %p96 = pnand %p94, %p95
      %p97 = pneg %p96
      // Predicated region
      $region9: #{tpu_custom_call.1} parent=5 // pred_check
        _
      $region10: #{tpu_custom_call.1} parent=5 // pred_check_branch
        %99 = sbr.rel (%p96) target = $region12
      $region11: #{tpu_custom_call.1} parent=5 // pred_region
        %s100 = ssub.s32 %s8, 1
      $region12: #{tpu_custom_call.1} parent=5 // pred_fallthru
        _
      %p101 = scmp.lt.s32.totalorder %s8, 4
      // Predicated region
      $region13: #{tpu_custom_call.1} parent=5 // pred_check
        %p102 = pneg %p101
      $region14: #{tpu_custom_call.1} parent=5 // pred_check_branch
        %104 = sbr.rel (%p102) target = $region16
      $region15: #{tpu_custom_call.1} parent=5 // pred_region
        // Predicated region
        $region17: #{tpu_custom_call.1} parent=15 // pred_check
          %p105 = pneg %p28
        $region18: #{tpu_custom_call.1} parent=15 // pred_check_branch
          %107 = sbr.rel (%p105) target = $region20
        $region19: #{tpu_custom_call.1} parent=15 // pred_region
          %s108 = smul.u32 4, %s8
          %s109 = ssub.s32 13, %s108
          %p110 = scmp.lt.s32.totalorder %s109, 4
          %s111 = scalar_select %p110, %s109, 4
          %s112 = smul.u32 8, %s111
          %p113 = scmp.lt.s32.totalorder %s108, 12
          %s114 = scalar_select %p113, %s108, 12
          %s115 = smul.addr %s114, 8
          %s116 = scalar_lea.vmem %s0, %s115
          %s117 = smul.u32 4, %s8
          %s118 = ssub.s32 13, %s117
          %p119 = scmp.lt.s32.totalorder %s118, 4
          %s120 = scalar_select %p119, %s118, 4
          %s121 = smul.u32 8, %s120
        $region20: #{tpu_custom_call.1} parent=15 // pred_fallthru
          _
        // Predicated region
        $region21: #{tpu_custom_call.1} parent=15 // pred_check
          %p122 = pneg %p54
        $region22: #{tpu_custom_call.1} parent=15 // pred_check_branch
          %124 = sbr.rel (%p122) target = $region24
        $region23: #{tpu_custom_call.1} parent=15 // pred_region
          %s125 = smul.u32 4, %s8
          %s126 = ssub.s32 13, %s125
          %p127 = scmp.lt.s32.totalorder %s126, 4
          %s128 = scalar_select %p127, %s126, 4
          %s129 = smul.u32 8, %s128
          %p130 = scmp.lt.s32.totalorder %s125, 12
          %s131 = scalar_select %p130, %s125, 12
          %s132 = smul.addr %s131, 8
          %s133 = scalar_lea.vmem %s1, %s132
          %s134 = smul.u32 4, %s8
          %s135 = ssub.s32 13, %s134
          %p136 = scmp.lt.s32.totalorder %s135, 4
          %s137 = scalar_select %p136, %s135, 4
          %s138 = smul.u32 8, %s137
        $region24: #{tpu_custom_call.1} parent=15 // pred_fallthru
          _
      $region16: #{tpu_custom_call.1} parent=5 // pred_fallthru
        _
      %p139 = scmp.le.s32.totalorder 1, %s8
      %p140 = scmp.lt.s32.totalorder %s8, 5
      %p141 = pnand %p139, %p140
      %p142 = pneg %p141
      // Predicated region
      $region25: #{tpu_custom_call.1} parent=5 // pred_check
        _
      $region26: #{tpu_custom_call.1} parent=5 // pred_check_branch
        %144 = sbr.rel (%p141) target = $region28
      $region27: #{tpu_custom_call.1} parent=5 // pred_region
        %s145 = ssub.s32 %s8, 1
        %s146 = smul.u32 4, %s13
        %s147 = ssub.s32 13, %s146
        %p148 = scmp.lt.s32.totalorder %s147, 4
        %s149 = scalar_select %p148, %s147, 4
        %s150 = smul.u32 8, %s149
        %p151 = scmp.lt.s32.totalorder %s146, 12
        %s152 = scalar_select %p151, %s146, 12
        %s153 = smul.addr %s152, 8
        %s154 = scalar_lea.vmem %s0, %s153
        %p155 = pneg %p34
        %p156 = pneg %p31
        %s157 = smul.u32 4, %s13
        %s158 = ssub.s32 13, %s157
        %p159 = scmp.lt.s32.totalorder %s158, 4
        %s160 = scalar_select %p159, %s158, 4
        %s161 = smul.u32 8, %s160
        %p162 = scmp.lt.s32.totalorder %s157, 12
        %s163 = scalar_select %p162, %s157, 12
        %s164 = smul.addr %s163, 8
        %s165 = scalar_lea.vmem %s1, %s164
        %p166 = pneg %p60
        %p167 = pneg %p57
        %p168 = pneg %p86
        %p169 = pneg %p83
        %s170 = sand.u32 %s73, 1
        %s171 = sand.u32 %s73, 1
        %s172 = smul.addr %s171, 32
        %s173 = scalar_lea.vmem [#allocation2], %s172
        %s174 = smul.u32 4, %s13
        %s175 = ssub.s32 13, %s174
        %p176 = scmp.lt.s32.totalorder %s175, 4
        %s177 = scalar_select %p176, %s175, 4
        %s178 = smul.u32 8, %s177
        %p179 = scmp.lt.s32.totalorder %s174, 12
        %s180 = scalar_select %p179, %s174, 12
        %s181 = smul.addr %s180, 8
        %s182 = scalar_lea.vmem %s0, %s181
        %s183 = smul.u32 4, %s13
        %s184 = ssub.s32 13, %s183
        %p185 = scmp.lt.s32.totalorder %s184, 4
        %s186 = scalar_select %p185, %s184, 4
        %s187 = smul.u32 8, %s186
        %s188 = smul.u32 4, %s13
        %s189 = ssub.s32 13, %s188
        %p190 = scmp.lt.s32.totalorder %s189, 4
        %s191 = scalar_select %p190, %s189, 4
        %s192 = smul.u32 8, %s191
        %p193 = scmp.lt.s32.totalorder %s188, 12
        %s194 = scalar_select %p193, %s188, 12
        %s195 = smul.addr %s194, 8
        %s196 = scalar_lea.vmem %s1, %s195
        %s197 = smul.u32 4, %s13
        %s198 = ssub.s32 13, %s197
        %p199 = scmp.lt.s32.totalorder %s198, 4
        %s200 = scalar_select %p199, %s198, 4
        %s201 = smul.u32 8, %s200
        %s202 = smul.u32 4, %s13
        %s203 = ssub.s32 13, %s202
        %p204 = scmp.lt.s32.totalorder %s203, 4
        %s205 = scalar_select %p204, %s203, 4
        %s206 = smul.u32 8, %s205
        %v207 = vld [vmem:[%s182] sm:$0xff]
        %v208 = vld [vmem:[%s182 + $0x8] sm:$0xff]
        %v209 = vld [vmem:[%s182 + $0x10] sm:$0xff]
        %v210 = vld [vmem:[%s182 + $0x18] sm:$0xff]
        %v211 = vld [vmem:[%s196] sm:$0xff]
        %v212 = vld [vmem:[%s196 + $0x8] sm:$0xff]
        %v213 = vld [vmem:[%s196 + $0x10] sm:$0xff]
        %v214 = vld [vmem:[%s196 + $0x18] sm:$0xff]
        %v215 = vlaneseq
        %v216 = vand.u32 %v215, 127
        %217 = vset.pattern.permute.xlu0 0
        %218 = vperm.xlu0 %217, %v211
        %v219 = vpop.permute.xlu0 %218
        %220 = vset.pattern.permute.xlu0 0
        %221 = vperm.xlu0 %220, %v212
        %v222 = vpop.permute.xlu0 %221
        %223 = vset.pattern.permute.xlu0 0
        %224 = vperm.xlu0 %223, %v213
        %v225 = vpop.permute.xlu0 %224
        %226 = vset.pattern.permute.xlu0 0
        %227 = vperm.xlu0 %226, %v214
        %v228 = vpop.permute.xlu0 %227
        %vm229 = vcmp.eq.s32.totalorder %v216, %v219
        %vm230 = vcmp.eq.s32.totalorder %v216, %v222
        %vm231 = vcmp.eq.s32.totalorder %v216, %v225
        %vm232 = vcmp.eq.s32.totalorder %v216, %v228
        %v233 = vand.u32 2147483647, %v207
        %v234 = vand.u32 2147483647, %v208
        %v235 = vand.u32 2147483647, %v209
        %v236 = vand.u32 2147483647, %v210
        %v237 = vsub.f32 0.0, %v233
        %v238 = vsub.f32 0.0, %v234
        %v239 = vsub.f32 0.0, %v235
        %v240 = vsub.f32 0.0, %v236
        %v241 = vmul.f32 %v237, 1.442695
        %v242 = vpow.pop %v241
        %v243 = vmul.f32 %v238, 1.442695
        %v244 = vpow.pop %v243
        %v245 = vmul.f32 %v239, 1.442695
        %v246 = vpow.pop %v245
        %v247 = vmul.f32 %v240, 1.442695
        %v248 = vpow.pop %v247
        %v249 = vadd.f32 %v242, 1.0
        %v250 = vadd.f32 %v244, 1.0
        %v251 = vadd.f32 %v246, 1.0
        %v252 = vadd.f32 %v248, 1.0
        %v253 = vrcp.pop %v249
        %v254 = vmul.f32 %v249, %v253
        %v255 = vsub.f32 1.0, %v254
        %v256 = vmul.f32 %v253, %v255
        %v257 = vadd.f32 %v253, %v256
        %vm258 = vweird.f32 %v249
        %vm259 = vweird.f32 %v253
        %vm260 = vmor %vm258, %vm259
        %v261 = vsel %vm260, %v253, %v257
        %v262 = vand.u32 2147483647, %v249
        %vm263 = vcmp.eq.f32.partialorder %v262, 8.507059e+37
        %v264 = vand.u32 %v249, 2147483648
        %v265 = vor.u32 1.1754944e-38, %v264
        %v266 = vsel %vm263, %v265, %v261
        %v267 = vrcp.pop %v250
        %v268 = vmul.f32 %v250, %v267
        %v269 = vsub.f32 1.0, %v268
        %v270 = vmul.f32 %v267, %v269
        %v271 = vadd.f32 %v267, %v270
        %vm272 = vweird.f32 %v250
        %vm273 = vweird.f32 %v267
        %vm274 = vmor %vm272, %vm273
        %v275 = vsel %vm274, %v267, %v271
        %v276 = vand.u32 2147483647, %v250
        %vm277 = vcmp.eq.f32.partialorder %v276, 8.507059e+37
        %v278 = vand.u32 %v250, 2147483648
        %v279 = vor.u32 1.1754944e-38, %v278
        %v280 = vsel %vm277, %v279, %v275
        %v281 = vrcp.pop %v251
        %v282 = vmul.f32 %v251, %v281
        %v283 = vsub.f32 1.0, %v282
        %v284 = vmul.f32 %v281, %v283
        %v285 = vadd.f32 %v281, %v284
        %vm286 = vweird.f32 %v251
        %vm287 = vweird.f32 %v281
        %vm288 = vmor %vm286, %vm287
        %v289 = vsel %vm288, %v281, %v285
        %v290 = vand.u32 2147483647, %v251
        %vm291 = vcmp.eq.f32.partialorder %v290, 8.507059e+37
        %v292 = vand.u32 %v251, 2147483648
        %v293 = vor.u32 1.1754944e-38, %v292
        %v294 = vsel %vm291, %v293, %v289
        %v295 = vrcp.pop %v252
        %v296 = vmul.f32 %v252, %v295
        %v297 = vsub.f32 1.0, %v296
        %v298 = vmul.f32 %v295, %v297
        %v299 = vadd.f32 %v295, %v298
        %vm300 = vweird.f32 %v252
        %vm301 = vweird.f32 %v295
        %vm302 = vmor %vm300, %vm301
        %v303 = vsel %vm302, %v295, %v299
        %v304 = vand.u32 2147483647, %v252
        %vm305 = vcmp.eq.f32.partialorder %v304, 8.507059e+37
        %v306 = vand.u32 %v252, 2147483648
        %v307 = vor.u32 1.1754944e-38, %v306
        %v308 = vsel %vm305, %v307, %v303
        %vm309 = vcmp.ge.f32.partialorder %v207, 0.0
        %vm310 = vcmp.ge.f32.partialorder %v208, 0.0
        %vm311 = vcmp.ge.f32.partialorder %v209, 0.0
        %vm312 = vcmp.ge.f32.partialorder %v210, 0.0
        %v313 = vmul.f32 %v242, %v266
        %v314 = vmul.f32 %v244, %v280
        %v315 = vmul.f32 %v246, %v294
        %v316 = vmul.f32 %v248, %v308
        %v317 = vsel %vm309, %v266, %v313
        %v318 = vsel %vm310, %v280, %v314
        %v319 = vsel %vm311, %v294, %v315
        %v320 = vsel %vm312, %v308, %v316
        %v321 = vsub.f32 1.0, %v317
        %v322 = vsub.f32 1.0, %v318
        %v323 = vsub.f32 1.0, %v319
        %v324 = vsub.f32 1.0, %v320
        %v325 = vsel %vm229, %v321, %v317
        %v326 = vsel %vm230, %v322, %v318
        %v327 = vsel %vm231, %v323, %v319
        %v328 = vsel %vm232, %v324, %v320
        %v329 = vsel %vm229, 0.25, 0.75
        %v330 = vsel %vm230, 0.25, 0.75
        %v331 = vsel %vm231, 0.25, 0.75
        %v332 = vsel %vm232, 0.25, 0.75
        %v333 = vmul.f32 %v325, %v325
        %v334 = vmul.f32 %v326, %v326
        %v335 = vmul.f32 %v327, %v327
        %v336 = vmul.f32 %v328, %v328
        %v337 = vmax.f32 %v207, 0.0
        %v338 = vmax.f32 %v208, 0.0
        %v339 = vmax.f32 %v209, 0.0
        %v340 = vmax.f32 %v210, 0.0
        %v341 = vsel %vm229, %v207, 0.0
        %v342 = vsel %vm230, %v208, 0.0
        %v343 = vsel %vm231, %v209, 0.0
        %v344 = vsel %vm232, %v210, 0.0
        %v345 = vsub.f32 %v337, %v341
        %v346 = vsub.f32 %v338, %v342
        %v347 = vsub.f32 %v339, %v343
        %v348 = vsub.f32 %v340, %v344
        %v349 = vadd.f32 %v242, 1.0
        %v350 = vlog2.pop %v349
        %v351 = vmul.f32 %v350, 0.6931472
        %v352 = vmul.f32 -0.5, %v242
        %v353 = vadd.f32 %v352, 1.0
        %v354 = vmul.f32 %v353, %v242
        %v355 = vand.u32 2147483647, %v242
        %vm356 = vcmp.lt.f32.partialorder %v355, 0.0004427343
        %v357 = vsel %vm356, %v354, %v351
        %v358 = vadd.f32 %v244, 1.0
        %v359 = vlog2.pop %v358
        %v360 = vmul.f32 %v359, 0.6931472
        %v361 = vmul.f32 -0.5, %v244
        %v362 = vadd.f32 %v361, 1.0
        %v363 = vmul.f32 %v362, %v244
        %v364 = vand.u32 2147483647, %v244
        %vm365 = vcmp.lt.f32.partialorder %v364, 0.0004427343
        %v366 = vsel %vm365, %v363, %v360
        %v367 = vadd.f32 %v246, 1.0
        %v368 = vlog2.pop %v367
        %v369 = vmul.f32 %v368, 0.6931472
        %v370 = vmul.f32 -0.5, %v246
        %v371 = vadd.f32 %v370, 1.0
        %v372 = vmul.f32 %v371, %v246
        %v373 = vand.u32 2147483647, %v246
        %vm374 = vcmp.lt.f32.partialorder %v373, 0.0004427343
        %v375 = vsel %vm374, %v372, %v369
        %v376 = vadd.f32 %v248, 1.0
        %v377 = vlog2.pop %v376
        %v378 = vmul.f32 %v377, 0.6931472
        %v379 = vmul.f32 -0.5, %v248
        %v380 = vadd.f32 %v379, 1.0
        %v381 = vmul.f32 %v380, %v248
        %v382 = vand.u32 2147483647, %v248
        %vm383 = vcmp.lt.f32.partialorder %v382, 0.0004427343
        %v384 = vsel %vm383, %v381, %v378
        %v385 = vadd.f32 %v345, %v357
        %v386 = vadd.f32 %v346, %v366
        %v387 = vadd.f32 %v347, %v375
        %v388 = vadd.f32 %v348, %v384
        %v389 = vmul.f32 %v329, %v333
        %v390 = vmul.f32 %v330, %v334
        %v391 = vmul.f32 %v331, %v335
        %v392 = vmul.f32 %v332, %v336
        %v393 = vmul.f32 %v385, %v389
        %v394 = vmul.f32 %v386, %v390
        %v395 = vmul.f32 %v387, %v391
        %v396 = vmul.f32 %v388, %v392
        %vm397 = vcmask 130048
        %398 = vst.msk [vmem:[%s173] sm:$0xff] %vm397, %v393
        %399 = vst.msk [vmem:[%s173 + $0x8] sm:$0xff] %vm397, %v394
        %400 = vst.msk [vmem:[%s173 + $0x10] sm:$0xff] %vm397, %v395
        %401 = vst.msk [vmem:[%s173 + $0x18] sm:$0xff] %vm397, %v396
        %s402 = sand.u32 %s73, 1
        %s403 = sand.u32 %s73, 1
        %s404 = smul.addr %s403, 32
        %s405 = scalar_lea.vmem [#allocation2], %s404
        // Predicated region
        $region29: #{tpu_custom_call.1} parent=27 // pred_check
          %p406 = pneg %p83
        $region30: #{tpu_custom_call.1} parent=27 // pred_check_branch
          %408 = sbr.rel (%p406) target = $region32
        $region31: #{tpu_custom_call.1} parent=27 // pred_region
          %s409 = smul.u32 4, %s13
          %s410 = ssub.s32 13, %s409
          %p411 = scmp.lt.s32.totalorder %s410, 4
          %s412 = scalar_select %p411, %s410, 4
          %s413 = smul.u32 8, %s412
          %p414 = scmp.ne.s32.totalorder 0, %s413
          %s415 = smul.addr %s409, 8
          %s416 = scalar_lea.vmem %s2, %s415
          // Predicated region
          $region33: #{tpu_custom_call.1} parent=31 // pred_check
            %p417 = pneg %p414
          $region34: #{tpu_custom_call.1} parent=31 // pred_check_branch
            %419 = sbr.rel (%p417) target = $region36
          $region35: #{tpu_custom_call.1} parent=31 // pred_region
            // Predicated region
            $region37: #{tpu_custom_call.1} parent=35 // pred_check
              _
            $region38: #{tpu_custom_call.1} parent=35 // pred_check_branch
              %421 = sbr.rel (0) target = $region40
            $region39: #{tpu_custom_call.1} parent=35 // pred_region
              // Predicated region
              $region59: #{tpu_custom_call.1} parent=39 // pred_check
                _
              $region60: #{tpu_custom_call.1} parent=39 // pred_check_branch
                %477 = sbr.rel (0) target = $region62
              $region61: #{tpu_custom_call.1} parent=39 // pred_region
                %s478 = sshrl.u32 %s412, 2
                // While loop
                $region63: #{tpu_custom_call.1} parent=61 // loop_pre_header
                  _
                $region64: #{tpu_custom_call.1} parent=61 // loop_header
                  %s480 = sphi 0, %s482
                  %p481 = scmp.ge.s32.totalorder %s480, %s478
                  %s485 = sphi 0, %s498
                  %s486 = sphi %s405, %s501
                  %s487 = sphi %s416, %s502
                $region65: #{tpu_custom_call.1} parent=61 // loop_header_branch
                  %484 = sbr.rel (%p481) target = $region69
                $region66: #{tpu_custom_call.1} parent=61 // loop_body
                  %v488 = vld [vmem:[%s486] sm:$0xff]
                  %489 = vst [vmem:[%s487] sm:$0xff] %v488
                  %v490 = vld [vmem:[%s486 + $0x8] sm:$0xff]
                  %491 = vst [vmem:[%s487 + $0x8] sm:$0xff] %v490
                  %v492 = vld [vmem:[%s486 + $0x10] sm:$0xff]
                  %493 = vst [vmem:[%s487 + $0x10] sm:$0xff] %v492
                  %v494 = vld [vmem:[%s486 + $0x18] sm:$0xff]
                  %495 = vst [vmem:[%s487 + $0x18] sm:$0xff] %v494
                  %s496 = sadd.s32 1, %s485
                  %p497 = scmp.ge.s32.totalorder %s496, %s478
                  %s498 = scalar_select %p497, 0, %s496
                  %s499 = smul.u32 %s498, 32
                  %s500 = smul.u32 %s498, 32
                  %s501 = scalar_lea.vmem %s405, %s499 [#allocation2]
                  %s502 = scalar_lea.vmem %s416, %s500
                $region67: #{tpu_custom_call.1} parent=61 // loop_footer
                  %s482 = sadd.s32 %s480, 1
                $region68: #{tpu_custom_call.1} parent=61 // loop_footer_branch
                  %479 = sbr.rel target = $region64
                $region69: #{tpu_custom_call.1} parent=61 // loop_exit
                  _
                %s503 = sshrl.u32 %s412, 2
                %s504 = sand.u32 %s412, 3
                %s505 = smul.u32 %s503, 4
                %s506 = smul.u32 8, %s505
                %s507 = scalar_lea.vmem %s405, %s506 [#allocation2]
                %s508 = smul.u32 8, %s505
                %s509 = scalar_lea.vmem %s416, %s508
                // While loop
                $region70: #{tpu_custom_call.1} parent=61 // loop_pre_header
                  _
                $region71: #{tpu_custom_call.1} parent=61 // loop_header
                  %s511 = sphi 0, %s513
                  %p512 = scmp.ge.s32.totalorder %s511, %s504
                  %s516 = sphi 0, %s523
                  %s517 = sphi %s507, %s526
                  %s518 = sphi %s509, %s527
                $region72: #{tpu_custom_call.1} parent=61 // loop_header_branch
                  %515 = sbr.rel (%p512) target = $region76
                $region73: #{tpu_custom_call.1} parent=61 // loop_body
                  %v519 = vld [vmem:[%s517] sm:$0xff]
                  %520 = vst [vmem:[%s518] sm:$0xff] %v519
                  %s521 = sadd.s32 1, %s516
                  %p522 = scmp.ge.s32.totalorder %s521, %s504
                  %s523 = scalar_select %p522, 0, %s521
                  %s524 = smul.u32 %s523, 8
                  %s525 = smul.u32 %s523, 8
                  %s526 = scalar_lea.vmem %s507, %s524 [#allocation2]
                  %s527 = scalar_lea.vmem %s509, %s525
                $region74: #{tpu_custom_call.1} parent=61 // loop_footer
                  %s513 = sadd.s32 %s511, 1
                $region75: #{tpu_custom_call.1} parent=61 // loop_footer_branch
                  %510 = sbr.rel target = $region71
                $region76: #{tpu_custom_call.1} parent=61 // loop_exit
                  _
              $region62: #{tpu_custom_call.1} parent=39 // pred_fallthru
                _
              // Predicated region
              $region77: #{tpu_custom_call.1} parent=39 // pred_check
                _
              $region78: #{tpu_custom_call.1} parent=39 // pred_check_branch
                %529 = sbr.rel target = $region80
              $region79: #{tpu_custom_call.1} parent=39 // pred_region
                _
              $region80: #{tpu_custom_call.1} parent=39 // pred_fallthru
                _
            $region40: #{tpu_custom_call.1} parent=35 // pred_fallthru
              _
            // Predicated region
            $region41: #{tpu_custom_call.1} parent=35 // pred_check
              _
            $region42: #{tpu_custom_call.1} parent=35 // pred_check_branch
              %423 = sbr.rel target = $region44
            $region43: #{tpu_custom_call.1} parent=35 // pred_region
              %s425 = ssub.s32 256, 1
              %s426 = sshrl.u32 %s412, 2
              // While loop
              $region45: #{tpu_custom_call.1} parent=43 // loop_pre_header
                _
              $region46: #{tpu_custom_call.1} parent=43 // loop_header
                %s428 = sphi 0, %s430
                %p429 = scmp.ge.s32.totalorder %s428, %s426
                %s433 = sphi 0, %s446
                %s434 = sphi %s405, %s449
                %s435 = sphi %s416, %s450
              $region47: #{tpu_custom_call.1} parent=43 // loop_header_branch
                %432 = sbr.rel (%p429) target = $region51
              $region48: #{tpu_custom_call.1} parent=43 // loop_body
                %v436 = vld [vmem:[%s434] sm:%s425]
                %437 = vst [vmem:[%s435] sm:%s425] %v436
                %v438 = vld [vmem:[%s434 + $0x8] sm:%s425]
                %439 = vst [vmem:[%s435 + $0x8] sm:%s425] %v438
                %v440 = vld [vmem:[%s434 + $0x10] sm:%s425]
                %441 = vst [vmem:[%s435 + $0x10] sm:%s425] %v440
                %v442 = vld [vmem:[%s434 + $0x18] sm:%s425]
                %443 = vst [vmem:[%s435 + $0x18] sm:%s425] %v442
                %s444 = sadd.s32 1, %s433
                %p445 = scmp.ge.s32.totalorder %s444, %s426
                %s446 = scalar_select %p445, 0, %s444
                %s447 = smul.u32 %s446, 32
                %s448 = smul.u32 %s446, 32
                %s449 = scalar_lea.vmem %s405, %s447 [#allocation2]
                %s450 = scalar_lea.vmem %s416, %s448
              $region49: #{tpu_custom_call.1} parent=43 // loop_footer
                %s430 = sadd.s32 %s428, 1
              $region50: #{tpu_custom_call.1} parent=43 // loop_footer_branch
                %427 = sbr.rel target = $region46
              $region51: #{tpu_custom_call.1} parent=43 // loop_exit
                _
              %s451 = sshrl.u32 %s412, 2
              %s452 = sand.u32 %s412, 3
              %s453 = smul.u32 %s451, 4
              %s454 = smul.u32 8, %s453
              %s455 = scalar_lea.vmem %s405, %s454 [#allocation2]
              %s456 = smul.u32 8, %s453
              %s457 = scalar_lea.vmem %s416, %s456
              // While loop
              $region52: #{tpu_custom_call.1} parent=43 // loop_pre_header
                _
              $region53: #{tpu_custom_call.1} parent=43 // loop_header
                %s459 = sphi 0, %s461
                %p460 = scmp.ge.s32.totalorder %s459, %s452
                %s464 = sphi 0, %s471
                %s465 = sphi %s455, %s474
                %s466 = sphi %s457, %s475
              $region54: #{tpu_custom_call.1} parent=43 // loop_header_branch
                %463 = sbr.rel (%p460) target = $region58
              $region55: #{tpu_custom_call.1} parent=43 // loop_body
                %v467 = vld [vmem:[%s465] sm:%s425]
                %468 = vst [vmem:[%s466] sm:%s425] %v467
                %s469 = sadd.s32 1, %s464
                %p470 = scmp.ge.s32.totalorder %s469, %s452
                %s471 = scalar_select %p470, 0, %s469
                %s472 = smul.u32 %s471, 8
                %s473 = smul.u32 %s471, 8
                %s474 = scalar_lea.vmem %s455, %s472 [#allocation2]
                %s475 = scalar_lea.vmem %s457, %s473
              $region56: #{tpu_custom_call.1} parent=43 // loop_footer
                %s461 = sadd.s32 %s459, 1
              $region57: #{tpu_custom_call.1} parent=43 // loop_footer_branch
                %458 = sbr.rel target = $region53
              $region58: #{tpu_custom_call.1} parent=43 // loop_exit
                _
            $region44: #{tpu_custom_call.1} parent=35 // pred_fallthru
              _
          $region36: #{tpu_custom_call.1} parent=31 // pred_fallthru
            _
          %530 = vnop
        $region32: #{tpu_custom_call.1} parent=27 // pred_fallthru
          _
      $region28: #{tpu_custom_call.1} parent=5 // pred_fallthru
        _
      %p531 = scmp.le.s32.totalorder 2, %s8
      // Predicated region
      $region81: #{tpu_custom_call.1} parent=5 // pred_check
        %p532 = pneg %p531
      $region82: #{tpu_custom_call.1} parent=5 // pred_check_branch
        %534 = sbr.rel (%p532) target = $region84
      $region83: #{tpu_custom_call.1} parent=5 // pred_region
        %s535 = ssub.s32 %s8, 2
        // Predicated region
        $region85: #{tpu_custom_call.1} parent=83 // pred_check
          %p536 = pneg %p89
        $region86: #{tpu_custom_call.1} parent=83 // pred_check_branch
          %538 = sbr.rel (%p536) target = $region88
        $region87: #{tpu_custom_call.1} parent=83 // pred_region
          %s539 = sand.u32 %s74, 1
          %s540 = sand.u32 %s74, 1
          %s541 = smul.addr %s540, 32
          %s542 = scalar_lea.vmem [#allocation2], %s541
        $region88: #{tpu_custom_call.1} parent=83 // pred_fallthru
          _
      $region84: #{tpu_custom_call.1} parent=5 // pred_fallthru
        _
    $region6: #{tpu_custom_call.1} parent=1 // loop_footer
      %s12 = sadd.s32 1, %s8
    $region7: #{tpu_custom_call.1} parent=1 // loop_footer_branch
      %7 = sbr.rel target = $region3
    $region8: #{tpu_custom_call.1} parent=1 // loop_exit
      _

</llo_original>
